<compile_context>
chip_gen: v7x
topology: tpu7x:2x2x1
jax: 0.10.0
libtpu: 0.0.40
codegen_flags: <defaults>
</compile_context>

<pallas_src>
import functools

import jax
import jax.numpy as jnp
from jax.experimental import pallas as pl
from jax.experimental.pallas import tpu as pltpu


def _round_up(x, m):
    return ((x + m - 1) // m) * m


def _make_ffw_kernel(H, h_chunk, n_chunks):
    def kernel(x_ref, w1_ref, b1_ref, w2_ref, b2_ref, o_ref):
        # x_ref:  (TM, E)   row-tile of activations (native dtype)
        # w1_ref: (E, H)    proj_up weight (transposed)
        # b1_ref: (1, H)    proj_up bias
        # w2_ref: (H, E)    proj_down weight (transposed)
        # b2_ref: (1, E)    proj_down bias
        # o_ref:  (TM, E)   output row-tile
        x = x_ref[...]  # no upcast: feed MXU in native dtype, accumulate in f32

        tm = x_ref.shape[0]
        E = o_ref.shape[1]
        y = jnp.zeros((tm, E), jnp.float32)

        # Static (unrolled) loop over H chunks bounds the (tm, h_chunk) f32
        # intermediate; n_chunks == 1 for small/medium hidden sizes.
        for c in range(n_chunks):
            lo = c * h_chunk
            hi = min(H, lo + h_chunk)
            h = jnp.dot(x, w1_ref[:, lo:hi], preferred_element_type=jnp.float32)
            h = jnp.maximum(h + b1_ref[:, lo:hi].astype(jnp.float32), 0.0)
            y = y + jnp.dot(h.astype(w2_ref.dtype), w2_ref[lo:hi, :],
                            preferred_element_type=jnp.float32)

        y = y + b2_ref[...].astype(jnp.float32)

        # dropout: inference mode -> identity
        o_ref[...] = y.astype(o_ref.dtype)

    return kernel


def feed_forward(x, w1, b1, w2, b2, *, tm=256, interm_budget_bytes=8 << 20):
    """x: (B, T, E); w1: (E, H); b1: (H,); w2: (H, E); b2: (E,)."""
    B, T, E = x.shape
    E2, H = w1.shape
    assert E2 == E and w2.shape == (H, E) and b1.shape == (H,) and b2.shape == (E,)
    M = B * T

    # --- row-tile selection -------------------------------------------------
    # Multiple of 8 (f32 sublanes); big tile fills the 128/256-wide MXU and
    # amortizes the ~0.35us grid-step overhead.  If the whole M fits in one
    # tile, split into two blocks so the "parallel" axis can shard across the
    # two TensorCores on v7x.
    tm = max(8, (int(tm) // 8) * 8)
    if _round_up(M, 8) <= tm:
        tm = _round_up(pl.cdiv(M, 2), 8) if M > 8 else 8
    M_pad = _round_up(M, tm)
    grid = (M_pad // tm,)

    # --- H-chunking of the intermediate ------------------------------------
    h_chunk = H
    if tm * H * 4 > interm_budget_bytes:
        h_chunk = max(128, ((interm_budget_bytes // (tm * 4)) // 128) * 128)
    n_chunks = pl.cdiv(H, h_chunk)

    # --- data prep ----------------------------------------------------------
    x2d = x.reshape(M, E)
    if M_pad != M:
        x2d = jnp.pad(x2d, ((0, M_pad - M), (0, 0)))
    b1_2d = b1.reshape(1, H)
    b2_2d = b2.reshape(1, E)

    # --- VMEM / cost accounting ---------------------------------------------
    dsz = jnp.dtype(x.dtype).itemsize
    wsz = jnp.dtype(w1.dtype).itemsize
    tile_io_bytes = 2 * 2 * tm * E * dsz                      # dbl-buffered x + out tiles
    weight_bytes = 2 * ((E * H + H * E) * wsz + (H + E) * wsz)  # whole weights (+ pipeline buf)
    interm_bytes = tm * h_chunk * 4 + tm * E * 4
    needed = tile_io_bytes + weight_bytes + interm_bytes
    vmem_limit = int(min(64 << 20, max(32 << 20, 2 * needed)))  # headroom, <= v7x physical

    flops = 4 * M * E * H  # 2*M*E*H per matmul, two matmuls
    bytes_accessed = 2 * M * E * dsz + (E * H + H * E + H + E) * wsz
    cost = pl.CostEstimate(flops=flops, transcendentals=0,
                           bytes_accessed=bytes_accessed)

    kernel = _make_ffw_kernel(H, h_chunk, n_chunks)

    out2d = pl.pallas_call(
        kernel,
        out_shape=jax.ShapeDtypeStruct((M_pad, E), x.dtype),
        grid_spec=pltpu.PrefetchScalarGridSpec(
            num_scalar_prefetch=0,
            grid=grid,
            in_specs=[
                pl.BlockSpec((tm, E), lambda i: (i, 0)),   # x row-tile
                pl.BlockSpec((E, H), lambda i: (0, 0)),    # w1 (whole, VMEM-resident)
                pl.BlockSpec((1, H), lambda i: (0, 0)),    # b1
                pl.BlockSpec((H, E), lambda i: (0, 0)),    # w2 (whole, VMEM-resident)
                pl.BlockSpec((1, E), lambda i: (0, 0)),    # b2
            ],
            out_specs=pl.BlockSpec((tm, E), lambda i: (i, 0)),
        ),
        compiler_params=pltpu.CompilerParams(
            dimension_semantics=("parallel",),
            vmem_limit_bytes=vmem_limit,
        ),
        cost_estimate=cost,
    )(x2d, w1, b1_2d, w2, b2_2d)

    if M_pad != M:
        out2d = out2d[:M]
    return out2d.reshape(B, T, E)


def reference(x, w1, b1, w2, b2):
    h = jnp.maximum(jnp.einsum("bte,eh->bth", x, w1) + b1, 0.0)
    return jnp.einsum("bth,he->bte", h, w2) + b2


if __name__ == "__main__":
    # Small shapes consistent with the module: n_embed=32, ratio=10 -> hidden=320
    B, T, E, RATIO = 2, 8, 32, 10
    H = RATIO * E
    dropout = 0.1  # unused in inference mode

    key = jax.random.PRNGKey(0)
    kx, kw1, kb1, kw2, kb2 = jax.random.split(key, 5)

    x = jax.random.normal(kx, (B, T, E), dtype=jnp.float32)
    # PyTorch nn.Linear stores weight as (out, in); we keep (in, out) layout
    # for the kernel (already "transposed").
    w1 = jax.random.normal(kw1, (E, H), dtype=jnp.float32) * (1.0 / (E ** 0.5))
    b1 = jax.random.normal(kb1, (H,), dtype=jnp.float32) * 0.01
    w2 = jax.random.normal(kw2, (H, E), dtype=jnp.float32) * (1.0 / (H ** 0.5))
    b2 = jax.random.normal(kb2, (E,), dtype=jnp.float32) * 0.01

    out = feed_forward(x, w1, b1, w2, b2)
    out = jax.block_until_ready(out)
    ref = reference(x, w1, b1, w2, b2)
    assert out.shape == (B, T, E)
    assert jnp.allclose(out, ref, atol=1e-4, rtol=1e-4), "mismatch vs reference"

    # Also exercise the padded/partial-tile path (M not a multiple of the tile).
    T2 = 13
    x2 = jax.random.normal(jax.random.PRNGKey(1), (B, T2, E), dtype=jnp.float32)
    out2 = jax.block_until_ready(feed_forward(x2, w1, b1, w2, b2))
    ref2 = reference(x2, w1, b1, w2, b2)
    assert out2.shape == (B, T2, E)
    assert jnp.allclose(out2, ref2, atol=1e-4, rtol=1e-4), "mismatch vs reference (padded M)"

    print("KERNEL_OK")
</pallas_src>

<mosaic_0001>
module attributes {stable_mosaic.version = 11 : i64} {
  func.func @kernel(%arg0: i32, %arg1: memref<8x32xf32, #tpu.memory_space<vmem>>, %arg2: memref<32x320xf32, #tpu.memory_space<vmem>>, %arg3: memref<1x320xf32, #tpu.memory_space<vmem>>, %arg4: memref<320x32xf32, #tpu.memory_space<vmem>>, %arg5: memref<1x32xf32, #tpu.memory_space<vmem>>, %arg6: memref<8x32xf32, #tpu.memory_space<vmem>>) attributes {dimension_semantics = [#tpu.dimension_semantics<parallel>], iteration_bounds = array<i64: 2>, scalar_prefetch = 0 : i64, scratch_operands = 0 : i64, tpu.core_type = #tpu.core_type<tc>, window_params = [{transform_indices = @transform_0, window_bounds = array<i64: 8, 32>}, {pipeline_mode = #tpu.pipeline_mode<synchronous>, transform_indices = @transform_1, window_bounds = array<i64: 32, 320>}, {pipeline_mode = #tpu.pipeline_mode<synchronous>, transform_indices = @transform_2, window_bounds = array<i64: 1, 320>}, {pipeline_mode = #tpu.pipeline_mode<synchronous>, transform_indices = @transform_3, window_bounds = array<i64: 320, 32>}, {pipeline_mode = #tpu.pipeline_mode<synchronous>, transform_indices = @transform_4, window_bounds = array<i64: 1, 32>}, {transform_indices = @transform_5, window_bounds = array<i64: 8, 32>}]} {
    %c0 = arith.constant 0 : index
    %c0_0 = arith.constant 0 : index
    %0 = vector.load %arg1[%c0, %c0_0] : memref<8x32xf32, #tpu.memory_space<vmem>>, vector<8x32xf32>
    %cst = arith.constant 0.000000e+00 : f32
    %1 = vector.broadcast %cst : f32 to vector<8x32xf32>
    %c0_1 = arith.constant 0 : index
    %c0_2 = arith.constant 0 : index
    %2 = vector.load %arg2[%c0_1, %c0_2] : memref<32x320xf32, #tpu.memory_space<vmem>>, vector<32x320xf32>
    %cst_3 = arith.constant dense<0.000000e+00> : vector<8x320xf32>
    %3 = tpu.matmul %0, %2, %cst_3 {dimension_numbers = #tpu.dot_dimension_numbers<[1], [0], [0], [1], [0, 0, 1, 1], [], []>} : vector<8x32xf32>, vector<32x320xf32>, vector<8x320xf32> -> vector<8x320xf32>
    %c0_4 = arith.constant 0 : index
    %c0_5 = arith.constant 0 : index
    %4 = vector.load %arg3[%c0_4, %c0_5] : memref<1x320xf32, #tpu.memory_space<vmem>>, vector<1x320xf32>
    %5 = vector.broadcast %4 : vector<1x320xf32> to vector<8x320xf32>
    %6 = arith.addf %3, %5 : vector<8x320xf32>
    %cst_6 = arith.constant 0.000000e+00 : f32
    %7 = vector.broadcast %cst_6 : f32 to vector<8x320xf32>
    %8 = arith.maximumf %6, %7 : vector<8x320xf32>
    %c0_7 = arith.constant 0 : index
    %c0_8 = arith.constant 0 : index
    %9 = vector.load %arg4[%c0_7, %c0_8] : memref<320x32xf32, #tpu.memory_space<vmem>>, vector<320x32xf32>
    %cst_9 = arith.constant dense<0.000000e+00> : vector<8x32xf32>
    %10 = tpu.matmul %8, %9, %cst_9 {dimension_numbers = #tpu.dot_dimension_numbers<[1], [0], [0], [1], [0, 0, 1, 1], [], []>} : vector<8x320xf32>, vector<320x32xf32>, vector<8x32xf32> -> vector<8x32xf32>
    %11 = arith.addf %1, %10 : vector<8x32xf32>
    %c0_10 = arith.constant 0 : index
    %c0_11 = arith.constant 0 : index
    %12 = vector.load %arg5[%c0_10, %c0_11] : memref<1x32xf32, #tpu.memory_space<vmem>>, vector<1x32xf32>
    %13 = vector.broadcast %12 : vector<1x32xf32> to vector<8x32xf32>
    %14 = arith.addf %11, %13 : vector<8x32xf32>
    %c0_12 = arith.constant 0 : index
    %c0_13 = arith.constant 0 : index
    %15 = vector.load %arg6[%c0_12, %c0_13] : memref<8x32xf32, #tpu.memory_space<vmem>>, vector<8x32xf32>
    tpu.vector_store %arg6[%c0_12, %c0_13], %14 {strides = array<i32>} : memref<8x32xf32, #tpu.memory_space<vmem>>, vector<8x32xf32>,
    return
  }
  func.func @transform_0(%arg0: i32) -> (i32, i32) {
    %c0_i32 = arith.constant 0 : i32
    %c0_i32_0 = arith.constant 0 : i32
    return %arg0, %c0_i32 : i32, i32
  }
  func.func @transform_1(%arg0: i32) -> (i32, i32) {
    %c0_i32 = arith.constant 0 : i32
    %c0_i32_0 = arith.constant 0 : i32
    %c0_i32_1 = arith.constant 0 : i32
    return %c0_i32, %c0_i32_0 : i32, i32
  }
  func.func @transform_2(%arg0: i32) -> (i32, i32) {
    %c0_i32 = arith.constant 0 : i32
    %c0_i32_0 = arith.constant 0 : i32
    %c0_i32_1 = arith.constant 0 : i32
    return %c0_i32, %c0_i32_0 : i32, i32
  }
  func.func @transform_3(%arg0: i32) -> (i32, i32) {
    %c0_i32 = arith.constant 0 : i32
    %c0_i32_0 = arith.constant 0 : i32
    %c0_i32_1 = arith.constant 0 : i32
    return %c0_i32, %c0_i32_0 : i32, i32
  }
  func.func @transform_4(%arg0: i32) -> (i32, i32) {
    %c0_i32 = arith.constant 0 : i32
    %c0_i32_0 = arith.constant 0 : i32
    %c0_i32_1 = arith.constant 0 : i32
    return %c0_i32, %c0_i32_0 : i32, i32
  }
  func.func @transform_5(%arg0: i32) -> (i32, i32) {
    %c0_i32 = arith.constant 0 : i32
    %c0_i32_0 = arith.constant 0 : i32
    return %arg0, %c0_i32 : i32, i32
  }
}

</mosaic_0001>

<llo_original>
// kernel: tpu_custom_call.1
$region0: #{tpu_custom_call.1}
  #allocation0 [shape = 'u32[]', space=smem, size = 0x4, offset = 0x4, fixed_abs, tag = 'smem constant byte address 0x4 - core index']
  #allocation1 [shape = 'u32[144,128]{1,0:T(1,128)}', space=vmem, size = 0x12000, scoped, tag = 'internal scratch']
  %s0 = inlined_call_operand.vmem [shape: f32[16,32], index: 0, kind: input, shape index: {}]
  %s1 = inlined_call_operand.vmem [shape: f32[32,320], index: 1, kind: input, shape index: {}]
  %s2 = inlined_call_operand.vmem [shape: f32[1,320], index: 2, kind: input, shape index: {}]
  %s3 = inlined_call_operand.vmem [shape: f32[320,32], index: 3, kind: input, shape index: {}]
  %s4 = inlined_call_operand.vmem [shape: f32[1,32], index: 4, kind: input, shape index: {}]
  %s5 = inlined_call_operand.hbm [shape: f32[16,32], index: 5, kind: output, shape index: {}]
  %s6 = sld [smem:[#allocation0]]
  $region53: #{tpu_custom_call.1} parent=0
    _
  %s8 = ssub.s32 1, %s6
  %s9 = scalar_select 0, %s8, %s6
  $region1: #{tpu_custom_call.1} parent=0
    #allocation2 [shape = 'u8[8192]{0}', space=vmem, size = 0x2000, scoped, tag = 'output window, operand 0']
    #allocation3 [shape = 's32[2]{0}', space=sflag, size = 0x8, scoped, tag = 'scoped memory for tpu_custom_call.1']
    %10 = vsyncpa [#allocation3], 0
    %s11 = scalar_lea.sflag [#allocation3], 1
    %12 = vsyncpa %s11, 0
    loop: start=0, step=1, limit=4
    $region2: #{tpu_custom_call.1} parent=1 // loop_pre_header
      _
    $region3: #{tpu_custom_call.1} parent=1 // loop_header
      %s14 = sphi 0, %s18
      %p15 = scmp.ge.s32.totalorder %s14, 4
      %s24 = sphi 0, %s26
      %s27 = sphi 0, %s24
      %s28 = sphi 0, %s27
      %s44 = sphi 0, %s28
      %s48 = sphi 0, %s48
      %s50 = sphi 0, %s48
      %s51 = sphi 0, %s50
      %s65 = sphi 0, %s51
      %s69 = sphi 0, %s69
      %s71 = sphi 0, %s69
      %s72 = sphi 0, %s71
      %s86 = sphi 0, %s72
      %s90 = sphi 0, %s90
      %s92 = sphi 0, %s90
      %s93 = sphi 0, %s92
      %s107 = sphi 0, %s93
      %s111 = sphi 0, %s111
      %s113 = sphi 0, %s111
      %s114 = sphi 0, %s113
      %s128 = sphi 0, %s114
      %s134 = sphi 0, %s136
      %s137 = sphi 0, %s134
      %s138 = sphi 0, %s137
      %s154 = sphi 0, %s138
    $region4: #{tpu_custom_call.1} parent=1 // loop_header_branch
      %17 = sbr.rel (%p15) target = $region8
    $region5: #{tpu_custom_call.1} parent=1 // loop_body
      %s19 = ssub.s32 %s14, 1
      %s20 = ssub.s32 %s14, 2
      %s21 = sadd.s32 %s14, 1
      %s22 = ssub.s32 %s14, %s21
      %p23 = scmp.eq.s32.totalorder %s22, 0
      %s25 = sadd.s32 %s24, 1
      %s26 = scalar_select %p23, %s24, %s25
      %p29 = pneg %p23
      %p30 = scmp.eq.s32.totalorder %s14, 1
      %p31 = por %p29, %p30
      %p32 = scmp.ne.s32.totalorder %s24, %s27
      %p33 = scmp.eq.s32.totalorder %s14, 0
      %p34 = por %p32, %p33
      %p35 = scmp.ne.s32.totalorder %s24, %s27
      %p36 = scmp.eq.s32.totalorder %s19, 1
      %p37 = por %p35, %p36
      %p38 = scmp.ne.s32.totalorder %s27, %s28
      %p39 = scmp.eq.s32.totalorder %s19, 0
      %p40 = por %p38, %p39
      %p41 = scmp.ne.s32.totalorder %s27, %s28
      %p42 = scmp.eq.s32.totalorder %s20, 1
      %p43 = por %p41, %p42
      %p45 = scmp.ne.s32.totalorder %s28, %s44
      %p46 = scmp.eq.s32.totalorder %s20, 0
      %p47 = por %p45, %p46
      %s49 = sadd.s32 %s48, 1
      %p52 = scmp.eq.s32.totalorder %s14, 1
      %p53 = scmp.ne.s32.totalorder %s48, %s50
      %p54 = scmp.eq.s32.totalorder %s14, 0
      %p55 = por %p53, %p54
      %p56 = scmp.ne.s32.totalorder %s48, %s50
      %p57 = scmp.eq.s32.totalorder %s19, 1
      %p58 = por %p56, %p57
      %p59 = scmp.ne.s32.totalorder %s50, %s51
      %p60 = scmp.eq.s32.totalorder %s19, 0
      %p61 = por %p59, %p60
      %p62 = scmp.ne.s32.totalorder %s50, %s51
      %p63 = scmp.eq.s32.totalorder %s20, 1
      %p64 = por %p62, %p63
      %p66 = scmp.ne.s32.totalorder %s51, %s65
      %p67 = scmp.eq.s32.totalorder %s20, 0
      %p68 = por %p66, %p67
      %s70 = sadd.s32 %s69, 1
      %p73 = scmp.eq.s32.totalorder %s14, 1
      %p74 = scmp.ne.s32.totalorder %s69, %s71
      %p75 = scmp.eq.s32.totalorder %s14, 0
      %p76 = por %p74, %p75
      %p77 = scmp.ne.s32.totalorder %s69, %s71
      %p78 = scmp.eq.s32.totalorder %s19, 1
      %p79 = por %p77, %p78
      %p80 = scmp.ne.s32.totalorder %s71, %s72
      %p81 = scmp.eq.s32.totalorder %s19, 0
      %p82 = por %p80, %p81
      %p83 = scmp.ne.s32.totalorder %s71, %s72
      %p84 = scmp.eq.s32.totalorder %s20, 1
      %p85 = por %p83, %p84
      %p87 = scmp.ne.s32.totalorder %s72, %s86
      %p88 = scmp.eq.s32.totalorder %s20, 0
      %p89 = por %p87, %p88
      %s91 = sadd.s32 %s90, 1
      %p94 = scmp.eq.s32.totalorder %s14, 1
      %p95 = scmp.ne.s32.totalorder %s90, %s92
      %p96 = scmp.eq.s32.totalorder %s14, 0
      %p97 = por %p95, %p96
      %p98 = scmp.ne.s32.totalorder %s90, %s92
      %p99 = scmp.eq.s32.totalorder %s19, 1
      %p100 = por %p98, %p99
      %p101 = scmp.ne.s32.totalorder %s92, %s93
      %p102 = scmp.eq.s32.totalorder %s19, 0
      %p103 = por %p101, %p102
      %p104 = scmp.ne.s32.totalorder %s92, %s93
      %p105 = scmp.eq.s32.totalorder %s20, 1
      %p106 = por %p104, %p105
      %p108 = scmp.ne.s32.totalorder %s93, %s107
      %p109 = scmp.eq.s32.totalorder %s20, 0
      %p110 = por %p108, %p109
      %s112 = sadd.s32 %s111, 1
      %p115 = scmp.eq.s32.totalorder %s14, 1
      %p116 = scmp.ne.s32.totalorder %s111, %s113
      %p117 = scmp.eq.s32.totalorder %s14, 0
      %p118 = por %p116, %p117
      %p119 = scmp.ne.s32.totalorder %s111, %s113
      %p120 = scmp.eq.s32.totalorder %s19, 1
      %p121 = por %p119, %p120
      %p122 = scmp.ne.s32.totalorder %s113, %s114
      %p123 = scmp.eq.s32.totalorder %s19, 0
      %p124 = por %p122, %p123
      %p125 = scmp.ne.s32.totalorder %s113, %s114
      %p126 = scmp.eq.s32.totalorder %s20, 1
      %p127 = por %p125, %p126
      %p129 = scmp.ne.s32.totalorder %s114, %s128
      %p130 = scmp.eq.s32.totalorder %s20, 0
      %p131 = por %p129, %p130
      %s132 = ssub.s32 %s14, %s21
      %p133 = scmp.eq.s32.totalorder %s132, 0
      %s135 = sadd.s32 %s134, 1
      %s136 = scalar_select %p133, %s134, %s135
      %p139 = pneg %p133
      %p140 = scmp.eq.s32.totalorder %s14, 1
      %p141 = por %p139, %p140
      %p142 = scmp.ne.s32.totalorder %s134, %s137
      %p143 = scmp.eq.s32.totalorder %s14, 0
      %p144 = por %p142, %p143
      %p145 = scmp.ne.s32.totalorder %s134, %s137
      %p146 = scmp.eq.s32.totalorder %s19, 1
      %p147 = por %p145, %p146
      %p148 = scmp.ne.s32.totalorder %s137, %s138
      %p149 = scmp.eq.s32.totalorder %s19, 0
      %p150 = por %p148, %p149
      %p151 = scmp.ne.s32.totalorder %s137, %s138
      %p152 = scmp.eq.s32.totalorder %s20, 1
      %p153 = por %p151, %p152
      %p155 = scmp.ne.s32.totalorder %s138, %s154
      %p156 = scmp.eq.s32.totalorder %s20, 0
      %p157 = por %p155, %p156
      %p158 = scmp.le.s32.totalorder 1, %s14
      %p159 = scmp.lt.s32.totalorder %s14, 3
      %p160 = pnand %p158, %p159
      %p161 = pneg %p160
      // Predicated region
      $region9: #{tpu_custom_call.1} parent=5 // pred_check
        _
      $region10: #{tpu_custom_call.1} parent=5 // pred_check_branch
        %163 = sbr.rel (%p160) target = $region12
      $region11: #{tpu_custom_call.1} parent=5 // pred_region
        %s164 = ssub.s32 %s14, 1
        // Predicated region
        $region13: #{tpu_custom_call.1} parent=11 // pred_check
          %p165 = pneg %p61
        $region14: #{tpu_custom_call.1} parent=11 // pred_check_branch
          %167 = sbr.rel (%p165) target = $region16
        $region15: #{tpu_custom_call.1} parent=11 // pred_region
          _
        $region16: #{tpu_custom_call.1} parent=11 // pred_fallthru
          _
        // Predicated region
        $region17: #{tpu_custom_call.1} parent=11 // pred_check
          %p168 = pneg %p82
        $region18: #{tpu_custom_call.1} parent=11 // pred_check_branch
          %170 = sbr.rel (%p168) target = $region20
        $region19: #{tpu_custom_call.1} parent=11 // pred_region
          _
        $region20: #{tpu_custom_call.1} parent=11 // pred_fallthru
          _
        // Predicated region
        $region21: #{tpu_custom_call.1} parent=11 // pred_check
          %p171 = pneg %p103
        $region22: #{tpu_custom_call.1} parent=11 // pred_check_branch
          %173 = sbr.rel (%p171) target = $region24
        $region23: #{tpu_custom_call.1} parent=11 // pred_region
          _
        $region24: #{tpu_custom_call.1} parent=11 // pred_fallthru
          _
        // Predicated region
        $region25: #{tpu_custom_call.1} parent=11 // pred_check
          %p174 = pneg %p124
        $region26: #{tpu_custom_call.1} parent=11 // pred_check_branch
          %176 = sbr.rel (%p174) target = $region28
        $region27: #{tpu_custom_call.1} parent=11 // pred_region
          _
        $region28: #{tpu_custom_call.1} parent=11 // pred_fallthru
          _
      $region12: #{tpu_custom_call.1} parent=5 // pred_fallthru
        _
      %p177 = scmp.lt.s32.totalorder %s14, 2
      // Predicated region
      $region29: #{tpu_custom_call.1} parent=5 // pred_check
        %p178 = pneg %p177
      $region30: #{tpu_custom_call.1} parent=5 // pred_check_branch
        %180 = sbr.rel (%p178) target = $region32
      $region31: #{tpu_custom_call.1} parent=5 // pred_region
        // Predicated region
        $region33: #{tpu_custom_call.1} parent=31 // pred_check
          %p181 = pneg %p34
        $region34: #{tpu_custom_call.1} parent=31 // pred_check_branch
          %183 = sbr.rel (%p181) target = $region36
        $region35: #{tpu_custom_call.1} parent=31 // pred_region
          %p184 = scmp.lt.s32.totalorder %s14, 1
          %s185 = scalar_select %p184, %s14, 1
          %s186 = smul.addr %s185, 8
          %s187 = scalar_lea.vmem %s0, %s186
        $region36: #{tpu_custom_call.1} parent=31 // pred_fallthru
          _
      $region32: #{tpu_custom_call.1} parent=5 // pred_fallthru
        _
      %p188 = scmp.le.s32.totalorder 1, %s14
      %p189 = scmp.lt.s32.totalorder %s14, 3
      %p190 = pnand %p188, %p189
      %p191 = pneg %p190
      // Predicated region
      $region37: #{tpu_custom_call.1} parent=5 // pred_check
        _
      $region38: #{tpu_custom_call.1} parent=5 // pred_check_branch
        %193 = sbr.rel (%p190) target = $region40
      $region39: #{tpu_custom_call.1} parent=5 // pred_region
        %s194 = ssub.s32 %s14, 1
        %p195 = scmp.lt.s32.totalorder %s19, 1
        %s196 = scalar_select %p195, %s19, 1
        %s197 = smul.addr %s196, 8
        %s198 = scalar_lea.vmem %s0, %s197
        %p199 = pneg %p40
        %p200 = pneg %p37
        %p201 = pneg %p61
        %p202 = pneg %p58
        %p203 = pneg %p82
        %p204 = pneg %p79
        %p205 = pneg %p103
        %p206 = pneg %p100
        %p207 = pneg %p124
        %p208 = pneg %p121
        %p209 = pneg %p150
        %p210 = pneg %p147
        %s211 = sand.u32 %s137, 1
        %s212 = scalar_lea.sflag [#allocation3], %s211
        %s213 = sand.u32 %s137, 1
        %s214 = smul.addr %s213, 8
        %s215 = scalar_lea.vmem [#allocation2], %s214
        %p216 = scmp.lt.s32.totalorder %s19, 1
        %s217 = scalar_select %p216, %s19, 1
        %s218 = smul.addr %s217, 8
        %s219 = scalar_lea.vmem %s0, %s218
        %v220 = vld [vmem:[%s219] sm:$0xff]
        %v221 = vld [vmem:[%s1] sm:$0xff]
        %v222 = vld [vmem:[%s1 + $0x8] sm:$0xff]
        %v223 = vld [vmem:[%s1 + $0x10] sm:$0xff]
        %v224 = vld [vmem:[%s1 + $0x18] sm:$0xff]
        %v225 = vld [vmem:[%s1 + $0x20] sm:$0xff]
        %v226 = vld [vmem:[%s1 + $0x28] sm:$0xff]
        %v227 = vld [vmem:[%s1 + $0x30] sm:$0xff]
        %v228 = vld [vmem:[%s1 + $0x38] sm:$0xff]
        %v229 = vld [vmem:[%s1 + $0x40] sm:$0xff]
        %v230 = vld [vmem:[%s1 + $0x48] sm:$0xff]
        %v231 = vld [vmem:[%s1 + $0x50] sm:$0xff]
        %v232 = vld [vmem:[%s1 + $0x58] sm:$0xff]
        %v233 = vld [vmem:[%s2] sm:$0x7]
        %v235 = vlaneseq
        %v236 = vshrl.u32 %v235, 7
        %v237 = vsub.s32 0, %v236
        %v238 = vrot.slane %v233, %v237
        %v239 = vlaneseq
        %v240 = vshrl.u32 %v239, 7
        %v241 = vsub.s32 1, %v240
        %v242 = vrot.slane %v233, %v241
        %v243 = vlaneseq
        %v244 = vshrl.u32 %v243, 7
        %v245 = vsub.s32 2, %v244
        %v246 = vrot.slane %v233, %v245
        %vm250 = vcmask 261120
        %v252 = vsel %vm250, %v220, 0
        %254 = vmatprep.subr.mxu0 %v222
        %255 = vmatpush1.msra.mxu0 %v221
        %256 = vmatprep.subr.mxu0 %v225
        %257 = vmatpush1.msra.mxu0 %v224
        %258 = vmatprep.subr.mxu0 %v228
        %259 = vmatpush1.msra.mxu0 %v227
        %260 = vmatprep.subr.mxu0 %v231
        %261 = vmatpush1.msra.mxu0 %v230
        %262 = vmatprep.subr.mxu0 0.0
        %263 = vmatpush1.msra.mxu0 0.0
        %264 = vmatprep.subr.mxu0 0.0
        %265 = vmatpush1.msra.mxu0 0.0
        %266 = vmatprep.subr.mxu0 0.0
        %267 = vmatpush1.msra.mxu0 0.0
        %268 = vmatprep.subr.mxu0 0.0
        %269 = vmatpush1.msra.mxu0 0.0
        %270 = vmatprep.subr.mxu0 0.0
        %271 = vmatpush1.msra.mxu0 0.0
        %272 = vmatprep.subr.mxu0 0.0
        %273 = vmatpush1.msra.mxu0 0.0
        %274 = vmatprep.subr.mxu0 0.0
        %275 = vmatpush1.msra.mxu0 0.0
        %276 = vmatprep.subr.mxu0 0.0
        %277 = vmatpush1.msra.mxu0 0.0
        %278 = vmatprep.subr.mxu0 0.0
        %279 = vmatpush1.msra.mxu0 0.0
        %280 = vmatprep.subr.mxu0 0.0
        %281 = vmatpush1.msra.mxu0 0.0
        %282 = vmatprep.subr.mxu0 0.0
        %283 = vmatpush1.msra.mxu0 0.0
        %284 = vmatprep.subr.mxu0 0.0
        %285 = vmatpush1.msra.mxu0 0.0
        %286 = vmatprep.subr.mxu0 0.0
        %287 = vmatpush1.msra.mxu0 0.0
        %288 = vmatprep.subr.mxu0 0.0
        %289 = vmatpush1.msra.mxu0 0.0
        %290 = vmatprep.subr.mxu0 0.0
        %291 = vmatpush1.msra.mxu0 0.0
        %292 = vmatprep.subr.mxu0 0.0
        %293 = vmatpush1.msra.mxu0 0.0
        %294 = vmatprep.subr.mxu0 0.0
        %295 = vmatpush1.msra.mxu0 0.0
        %296 = vmatprep.subr.mxu0 0.0
        %297 = vmatpush1.msra.mxu0 0.0
        %298 = vmatprep.subr.mxu0 0.0
        %299 = vmatpush1.msra.mxu0 0.0
        %300 = vmatprep.subr.mxu0 0.0
        %301 = vmatpush1.msra.mxu0 0.0
        %302 = vmatprep.subr.mxu0 0.0
        %303 = vmatpush1.msra.mxu0 0.0
        %304 = vmatprep.subr.mxu0 0.0
        %305 = vmatpush1.msra.mxu0 0.0
        %306 = vmatprep.subr.mxu0 0.0
        %307 = vmatpush1.msra.mxu0 0.0
        %308 = vmatprep.subr.mxu0 0.0
        %309 = vmatpush1.msra.mxu0 0.0
        %310 = vmatprep.subr.mxu0 0.0
        %311 = vmatpush1.msra.mxu0 0.0
        %312 = vmatprep.subr.mxu0 0.0
        %313 = vmatpush1.msra.mxu0 0.0
        %314 = vmatprep.subr.mxu0 0.0
        %315 = vmatpush1.msra.mxu0 0.0
        %316 = vmatprep.subr.mxu0 0.0
        %317 = vmatpush1.msra.mxu0 0.0
        %318 = vmatprep.mubr.f32.mxu0 0.0
        %319 = vmatmul.mubr.f32.gmra.mrb[0].mxu0 %v252
        %v320 = vpop.f32.mrb[0].mxu0
        %v321 = vadd.f32 %v238, %v320
        %v322 = vpop.f32.mrb[0].mxu0
        %v323 = vadd.f32 %v242, %v322
        %324 = vdwg.mxu0
        %325 = vmatprep.subr.mxu0 0.0
        %326 = vmatpush1.msra.mxu0 %v223
        %327 = vmatprep.subr.mxu0 0.0
        %328 = vmatpush1.msra.mxu0 %v226
        %329 = vmatprep.subr.mxu0 0.0
        %330 = vmatpush1.msra.mxu0 %v229
        %331 = vmatprep.subr.mxu0 0.0
        %332 = vmatpush1.msra.mxu0 %v232
        %333 = vmatprep.subr.mxu0 0.0
        %334 = vmatpush1.msra.mxu0 0.0
        %335 = vmatprep.subr.mxu0 0.0
        %336 = vmatpush1.msra.mxu0 0.0
        %337 = vmatprep.subr.mxu0 0.0
        %338 = vmatpush1.msra.mxu0 0.0
        %339 = vmatprep.subr.mxu0 0.0
        %340 = vmatpush1.msra.mxu0 0.0
        %341 = vmatprep.subr.mxu0 0.0
        %342 = vmatpush1.msra.mxu0 0.0
        %343 = vmatprep.subr.mxu0 0.0
        %344 = vmatpush1.msra.mxu0 0.0
        %345 = vmatprep.subr.mxu0 0.0
        %346 = vmatpush1.msra.mxu0 0.0
        %347 = vmatprep.subr.mxu0 0.0
        %348 = vmatpush1.msra.mxu0 0.0
        %349 = vmatprep.subr.mxu0 0.0
        %350 = vmatpush1.msra.mxu0 0.0
        %351 = vmatprep.subr.mxu0 0.0
        %352 = vmatpush1.msra.mxu0 0.0
        %353 = vmatprep.subr.mxu0 0.0
        %354 = vmatpush1.msra.mxu0 0.0
        %355 = vmatprep.subr.mxu0 0.0
        %356 = vmatpush1.msra.mxu0 0.0
        %357 = vmatprep.subr.mxu0 0.0
        %358 = vmatpush1.msra.mxu0 0.0
        %359 = vmatprep.subr.mxu0 0.0
        %360 = vmatpush1.msra.mxu0 0.0
        %361 = vmatprep.subr.mxu0 0.0
        %362 = vmatpush1.msra.mxu0 0.0
        %363 = vmatprep.subr.mxu0 0.0
        %364 = vmatpush1.msra.mxu0 0.0
        %365 = vmatprep.subr.mxu0 0.0
        %366 = vmatpush1.msra.mxu0 0.0
        %367 = vmatprep.subr.mxu0 0.0
        %368 = vmatpush1.msra.mxu0 0.0
        %369 = vmatprep.subr.mxu0 0.0
        %370 = vmatpush1.msra.mxu0 0.0
        %371 = vmatprep.subr.mxu0 0.0
        %372 = vmatpush1.msra.mxu0 0.0
        %373 = vmatprep.subr.mxu0 0.0
        %374 = vmatpush1.msra.mxu0 0.0
        %375 = vmatprep.subr.mxu0 0.0
        %376 = vmatpush1.msra.mxu0 0.0
        %377 = vmatprep.subr.mxu0 0.0
        %378 = vmatpush1.msra.mxu0 0.0
        %379 = vmatprep.subr.mxu0 0.0
        %380 = vmatpush1.msra.mxu0 0.0
        %381 = vmatprep.subr.mxu0 0.0
        %382 = vmatpush1.msra.mxu0 0.0
        %383 = vmatprep.subr.mxu0 0.0
        %384 = vmatpush1.msra.mxu0 0.0
        %385 = vmatprep.subr.mxu0 0.0
        %386 = vmatpush1.msra.mxu0 0.0
        %387 = vmatprep.subr.mxu0 0.0
        %388 = vmatpush1.msra.mxu0 0.0
        %389 = vmatprep.mubr.f32.mxu0 0.0
        %390 = vmatmul.mubr.f32.gmra.mrb[0].mxu0 %v252
        %v391 = vpop.f32.mrb[0].mxu0
        %v392 = vadd.f32 %v246, %v391
        %v393 = vpop.f32.mrb[0].mxu0
        %394 = vdwg.mxu0
        %v395 = vmax.f32 %v321, 0.0
        %v396 = vmax.f32 %v323, 0.0
        %v397 = vmax.f32 %v392, 0.0
        %v398 = vld [vmem:[%s3] sm:$0xff]
        %v399 = vld [vmem:[%s3 + $0x8] sm:$0xff]
        %v400 = vld [vmem:[%s3 + $0x10] sm:$0xff]
        %v401 = vld [vmem:[%s3 + $0x18] sm:$0xff]
        %v402 = vld [vmem:[%s3 + $0x20] sm:$0xff]
        %v403 = vld [vmem:[%s3 + $0x28] sm:$0xff]
        %v404 = vld [vmem:[%s3 + $0x30] sm:$0xff]
        %v405 = vld [vmem:[%s3 + $0x38] sm:$0xff]
        %v406 = vld [vmem:[%s3 + $0x40] sm:$0xff]
        %v407 = vld [vmem:[%s3 + $0x48] sm:$0xff]
        %v408 = vld [vmem:[%s3 + $0x50] sm:$0xff]
        %v409 = vld [vmem:[%s3 + $0x58] sm:$0xff]
        %v410 = vld [vmem:[%s3 + $0x60] sm:$0xff]
        %v411 = vld [vmem:[%s3 + $0x68] sm:$0xff]
        %v412 = vld [vmem:[%s3 + $0x70] sm:$0xff]
        %v413 = vld [vmem:[%s3 + $0x78] sm:$0xff]
        %v414 = vld [vmem:[%s3 + $0x80] sm:$0xff]
        %v415 = vld [vmem:[%s3 + $0x88] sm:$0xff]
        %v416 = vld [vmem:[%s3 + $0x90] sm:$0xff]
        %v417 = vld [vmem:[%s3 + $0x98] sm:$0xff]
        %v418 = vld [vmem:[%s3 + $0xa0] sm:$0xff]
        %v419 = vld [vmem:[%s3 + $0xa8] sm:$0xff]
        %v420 = vld [vmem:[%s3 + $0xb0] sm:$0xff]
        %v421 = vld [vmem:[%s3 + $0xb8] sm:$0xff]
        %v422 = vld [vmem:[%s3 + $0xc0] sm:$0xff]
        %v423 = vld [vmem:[%s3 + $0xc8] sm:$0xff]
        %v424 = vld [vmem:[%s3 + $0xd0] sm:$0xff]
        %v425 = vld [vmem:[%s3 + $0xd8] sm:$0xff]
        %v426 = vld [vmem:[%s3 + $0xe0] sm:$0xff]
        %v427 = vld [vmem:[%s3 + $0xe8] sm:$0xff]
        %v428 = vld [vmem:[%s3 + $0xf0] sm:$0xff]
        %v429 = vld [vmem:[%s3 + $0xf8] sm:$0xff]
        %v430 = vld [vmem:[%s3 + $0x100] sm:$0xff]
        %v431 = vld [vmem:[%s3 + $0x108] sm:$0xff]
        %v432 = vld [vmem:[%s3 + $0x110] sm:$0xff]
        %v433 = vld [vmem:[%s3 + $0x118] sm:$0xff]
        %v434 = vld [vmem:[%s3 + $0x120] sm:$0xff]
        %v435 = vld [vmem:[%s3 + $0x128] sm:$0xff]
        %v436 = vld [vmem:[%s3 + $0x130] sm:$0xff]
        %v437 = vld [vmem:[%s3 + $0x138] sm:$0xff]
        %v438 = vld [vmem:[%s4] sm:$0x1]
        %v440 = vlaneseq
        %v441 = vshrl.u32 %v440, 7
        %v442 = vsub.s32 0, %v441
        %v443 = vrot.slane %v438, %v442
        %vm445 = vcmask 523264
        %v447 = vsel %vm445, %v397, 0
        %449 = vmatprep.subr.mxu0 0.0
        %450 = vmatpush1.msra.mxu0 %v398
        %451 = vmatprep.subr.mxu0 0.0
        %452 = vmatpush1.msra.mxu0 %v399
        %453 = vmatprep.subr.mxu0 0.0
        %454 = vmatpush1.msra.mxu0 %v400
        %455 = vmatprep.subr.mxu0 0.0
        %456 = vmatpush1.msra.mxu0 %v401
        %457 = vmatprep.subr.mxu0 0.0
        %458 = vmatpush1.msra.mxu0 %v402
        %459 = vmatprep.subr.mxu0 0.0
        %460 = vmatpush1.msra.mxu0 %v403
        %461 = vmatprep.subr.mxu0 0.0
        %462 = vmatpush1.msra.mxu0 %v404
        %463 = vmatprep.subr.mxu0 0.0
        %464 = vmatpush1.msra.mxu0 %v405
        %465 = vmatprep.subr.mxu0 0.0
        %466 = vmatpush1.msra.mxu0 %v406
        %467 = vmatprep.subr.mxu0 0.0
        %468 = vmatpush1.msra.mxu0 %v407
        %469 = vmatprep.subr.mxu0 0.0
        %470 = vmatpush1.msra.mxu0 %v408
        %471 = vmatprep.subr.mxu0 0.0
        %472 = vmatpush1.msra.mxu0 %v409
        %473 = vmatprep.subr.mxu0 0.0
        %474 = vmatpush1.msra.mxu0 %v410
        %475 = vmatprep.subr.mxu0 0.0
        %476 = vmatpush1.msra.mxu0 %v411
        %477 = vmatprep.subr.mxu0 0.0
        %478 = vmatpush1.msra.mxu0 %v412
        %479 = vmatprep.subr.mxu0 0.0
        %480 = vmatpush1.msra.mxu0 %v413
        %481 = vmatprep.subr.mxu0 0.0
        %482 = vmatpush1.msra.mxu0 %v414
        %483 = vmatprep.subr.mxu0 0.0
        %484 = vmatpush1.msra.mxu0 %v415
        %485 = vmatprep.subr.mxu0 0.0
        %486 = vmatpush1.msra.mxu0 %v416
        %487 = vmatprep.subr.mxu0 0.0
        %488 = vmatpush1.msra.mxu0 %v417
        %489 = vmatprep.subr.mxu0 0.0
        %490 = vmatpush1.msra.mxu0 %v418
        %491 = vmatprep.subr.mxu0 0.0
        %492 = vmatpush1.msra.mxu0 %v419
        %493 = vmatprep.subr.mxu0 0.0
        %494 = vmatpush1.msra.mxu0 %v420
        %495 = vmatprep.subr.mxu0 0.0
        %496 = vmatpush1.msra.mxu0 %v421
        %497 = vmatprep.subr.mxu0 0.0
        %498 = vmatpush1.msra.mxu0 %v422
        %499 = vmatprep.subr.mxu0 0.0
        %500 = vmatpush1.msra.mxu0 %v423
        %501 = vmatprep.subr.mxu0 0.0
        %502 = vmatpush1.msra.mxu0 %v424
        %503 = vmatprep.subr.mxu0 0.0
        %504 = vmatpush1.msra.mxu0 %v425
        %505 = vmatprep.subr.mxu0 0.0
        %506 = vmatpush1.msra.mxu0 %v426
        %507 = vmatprep.subr.mxu0 0.0
        %508 = vmatpush1.msra.mxu0 %v427
        %509 = vmatprep.subr.mxu0 0.0
        %510 = vmatpush1.msra.mxu0 %v428
        %511 = vmatprep.subr.mxu0 0.0
        %512 = vmatpush1.msra.mxu0 %v429
        %513 = vmatprep.mubr.f32.mxu0 %v396
        %514 = vmatmul.mubr.f32.gmra.mrb[0].mxu0 %v395
        %v515 = vpop.f32.mrb[0].mxu0
        %v516 = vadd.f32 %v443, %v515
        %v517 = vpop.f32.mrb[0].mxu0
        %518 = vdwg.mxu0
        %519 = vmatprep.subr.mxu0 0.0
        %520 = vmatpush1.msra.mxu0 %v430
        %521 = vmatprep.subr.mxu0 0.0
        %522 = vmatpush1.msra.mxu0 %v431
        %523 = vmatprep.subr.mxu0 0.0
        %524 = vmatpush1.msra.mxu0 %v432
        %525 = vmatprep.subr.mxu0 0.0
        %526 = vmatpush1.msra.mxu0 %v433
        %527 = vmatprep.subr.mxu0 0.0
        %528 = vmatpush1.msra.mxu0 %v434
        %529 = vmatprep.subr.mxu0 0.0
        %530 = vmatpush1.msra.mxu0 %v435
        %531 = vmatprep.subr.mxu0 0.0
        %532 = vmatpush1.msra.mxu0 %v436
        %533 = vmatprep.subr.mxu0 0.0
        %534 = vmatpush1.msra.mxu0 %v437
        %535 = vmatprep.subr.mxu0 0.0
        %536 = vmatpush1.msra.mxu0 0.0
        %537 = vmatprep.subr.mxu0 0.0
        %538 = vmatpush1.msra.mxu0 0.0
        %539 = vmatprep.subr.mxu0 0.0
        %540 = vmatpush1.msra.mxu0 0.0
        %541 = vmatprep.subr.mxu0 0.0
        %542 = vmatpush1.msra.mxu0 0.0
        %543 = vmatprep.subr.mxu0 0.0
        %544 = vmatpush1.msra.mxu0 0.0
        %545 = vmatprep.subr.mxu0 0.0
        %546 = vmatpush1.msra.mxu0 0.0
        %547 = vmatprep.subr.mxu0 0.0
        %548 = vmatpush1.msra.mxu0 0.0
        %549 = vmatprep.subr.mxu0 0.0
        %550 = vmatpush1.msra.mxu0 0.0
        %551 = vmatprep.subr.mxu0 0.0
        %552 = vmatpush1.msra.mxu0 0.0
        %553 = vmatprep.subr.mxu0 0.0
        %554 = vmatpush1.msra.mxu0 0.0
        %555 = vmatprep.subr.mxu0 0.0
        %556 = vmatpush1.msra.mxu0 0.0
        %557 = vmatprep.subr.mxu0 0.0
        %558 = vmatpush1.msra.mxu0 0.0
        %559 = vmatprep.subr.mxu0 0.0
        %560 = vmatpush1.msra.mxu0 0.0
        %561 = vmatprep.subr.mxu0 0.0
        %562 = vmatpush1.msra.mxu0 0.0
        %563 = vmatprep.subr.mxu0 0.0
        %564 = vmatpush1.msra.mxu0 0.0
        %565 = vmatprep.subr.mxu0 0.0
        %566 = vmatpush1.msra.mxu0 0.0
        %567 = vmatprep.subr.mxu0 0.0
        %568 = vmatpush1.msra.mxu0 0.0
        %569 = vmatprep.subr.mxu0 0.0
        %570 = vmatpush1.msra.mxu0 0.0
        %571 = vmatprep.subr.mxu0 0.0
        %572 = vmatpush1.msra.mxu0 0.0
        %573 = vmatprep.subr.mxu0 0.0
        %574 = vmatpush1.msra.mxu0 0.0
        %575 = vmatprep.subr.mxu0 0.0
        %576 = vmatpush1.msra.mxu0 0.0
        %577 = vmatprep.subr.mxu0 0.0
        %578 = vmatpush1.msra.mxu0 0.0
        %579 = vmatprep.subr.mxu0 0.0
        %580 = vmatpush1.msra.mxu0 0.0
        %581 = vmatprep.subr.mxu0 0.0
        %582 = vmatpush1.msra.mxu0 0.0
        %583 = vmatprep.mubr.f32.mxu0 0.0
        %584 = vmatmul.mubr.f32.gmra.mrb[0].mxu0 %v447
        %v585 = vpop.f32.mrb[0].mxu0
        %v586 = vadd.f32 %v516, %v585
        %v587 = vpop.f32.mrb[0].mxu0
        %588 = vdwg.mxu0
        %589 = vst.msk [vmem:[%s215] sm:$0xff] %vm250, %v586
        %s590 = sand.u32 %s137, 1
        %s591 = scalar_lea.sflag [#allocation3], %s590
        %s592 = sand.u32 %s137, 1
        %s593 = smul.addr %s592, 8
        %s594 = scalar_lea.vmem [#allocation2], %s593
        // Predicated region
        $region41: #{tpu_custom_call.1} parent=39 // pred_check
          %p595 = pneg %p147
        $region42: #{tpu_custom_call.1} parent=39 // pred_check_branch
          %597 = sbr.rel (%p595) target = $region44
        $region43: #{tpu_custom_call.1} parent=39 // pred_region
          %s599 = ssub.s32 128, 128
          %600 = vsyncadd %s591, %s599
          %s601 = smul.addr %s19, 128
          %s602 = scalar_lea.hbm %s5, %s601
          %s604 = sshll.u32 %s594, 4
          %s605 = int_to_ptr.vmem [resolvable:$true] %s604
          %607 = dma.vmem_to_hbm [thread:$0]  %s605, 128, %s602, %s591
        $region44: #{tpu_custom_call.1} parent=39 // pred_fallthru
          _
      $region40: #{tpu_custom_call.1} parent=5 // pred_fallthru
        _
      %p608 = scmp.le.s32.totalorder 2, %s14
      // Predicated region
      $region45: #{tpu_custom_call.1} parent=5 // pred_check
        %p609 = pneg %p608
      $region46: #{tpu_custom_call.1} parent=5 // pred_check_branch
        %611 = sbr.rel (%p609) target = $region48
      $region47: #{tpu_custom_call.1} parent=5 // pred_region
        %s612 = ssub.s32 %s14, 2
        // Predicated region
        $region49: #{tpu_custom_call.1} parent=47 // pred_check
          %p613 = pneg %p153
        $region50: #{tpu_custom_call.1} parent=47 // pred_check_branch
          %615 = sbr.rel (%p613) target = $region52
        $region51: #{tpu_custom_call.1} parent=47 // pred_region
          %s616 = sand.u32 %s138, 1
          %s617 = scalar_lea.sflag [#allocation3], %s616
          %s618 = sand.u32 %s138, 1
          %s619 = smul.addr %s618, 8
          %s620 = scalar_lea.vmem [#allocation2], %s619
          %621 = dma.done %s617, 128
        $region52: #{tpu_custom_call.1} parent=47 // pred_fallthru
          _
      $region48: #{tpu_custom_call.1} parent=5 // pred_fallthru
        _
    $region6: #{tpu_custom_call.1} parent=1 // loop_footer
      %s18 = sadd.s32 1, %s14
    $region7: #{tpu_custom_call.1} parent=1 // loop_footer_branch
      %13 = sbr.rel target = $region3
    $region8: #{tpu_custom_call.1} parent=1 // loop_exit
      _
    %622 = vsyncpa [#allocation3], 1
    %s623 = scalar_lea.sflag [#allocation3], 1
    %624 = vsyncpa %s623, 1

</llo_original>
